<compile_context>
chip_gen: v7x
topology: tpu7x:2x2x1
jax: 0.10.0
libtpu: 0.0.40
codegen_flags: <defaults>
</compile_context>

<pallas_src>
import functools

import jax
import jax.numpy as jnp
from jax.experimental import pallas as pl
from jax.experimental.pallas import tpu as pltpu


def _round_up(x, m):
    return ((x + m - 1) // m) * m


def _vmem_capacity_bytes():
    """Physical VMEM per TensorCore (128 MiB v5e/v6e, 64 MiB v7x)."""
    try:
        return int(pltpu.get_tpu_info().vmem_capacity_bytes)
    except Exception:
        return 64 * 1024 * 1024  # conservative (v7x-safe) fallback


def _patch_embed_kernel(p_ref, w_ref, b_ref, o_ref):
    # p_ref: (tm, K)  bf16 patch tile
    # w_ref: (K, E)   bf16 projection weight (resident, single-buffered)
    # b_ref: (1, E)   f32 bias (resident, single-buffered)
    # o_ref: (tm, E)  output tile
    acc = jnp.dot(p_ref[...], w_ref[...], preferred_element_type=jnp.float32)
    o_ref[...] = (acc + b_ref[...]).astype(o_ref.dtype)


def _pick_tm(M, K, E, compute_dtype, out_dtype, budget_bytes):
    """Largest 128-aligned M tile whose pipelined buffers fit the VMEM budget."""
    cbytes = jnp.dtype(compute_dtype).itemsize
    obytes = jnp.dtype(out_dtype).itemsize
    # Weight + bias are single-buffered (pl.Buffered(1), constant block index).
    fixed = K * E * cbytes + E * 4
    tm = 128
    for cand in (2048, 1024, 768, 512, 256, 128):
        per_step = 2 * cand * K * cbytes + 2 * cand * E * obytes  # dbl-buffered
        if fixed + per_step <= budget_bytes:
            tm = cand
            break
    # Don't make the tile (much) bigger than the problem.
    tm = min(tm, _round_up(M, 128))
    # Megacore (v7x: 2 TensorCores share the "parallel" axis): keep >= 2 grid
    # steps when the problem is big enough.  No-op on single-TC v5e/v6e.
    if M > 128:
        while tm > 128 and (M + tm - 1) // tm < 2:
            tm -= 128
    return tm


def prepare_patch_embed_params(weight, bias, compute_dtype=jnp.bfloat16):
    """One-time parameter relayout (hoisted out of the forward path).

    weight: (E, C, p, p, p) Conv3d weight  ->  (K, E) compute_dtype,
            rows ordered (c, kh, kw, kd) to match Conv3d semantics.
    bias:   (E,)                           ->  (1, E) float32.
    """
    E = weight.shape[0]
    K = weight.size // E
    w2d = weight.reshape(E, K).T.astype(compute_dtype)   # (K, E)
    b2d = bias.astype(jnp.float32).reshape(1, E)          # (1, E)
    return w2d, b2d


def patch_embed_forward(x, w2d, b2d, patch_size, out_dtype=None,
                        compute_dtype=jnp.bfloat16):
    """x: (B, C, H, W, D); w2d: (K, E) prepared weight; b2d: (1, E) bias.

    Returns (B, Ho*Wo*Do, E) — identical semantics to PatchEmbed.forward
    (Conv3d stride=kernel, flatten(2).transpose(1,2), norm=None).
    """
    B, C, H, W, D = x.shape
    p = patch_size
    K, E = w2d.shape
    Ho, Wo, Do = H // p, W // p, D // p
    Np = Ho * Wo * Do
    M = B * Np
    assert K == C * p * p * p, "weight does not match (C, patch_size)"
    out_dtype = x.dtype if out_dtype is None else out_dtype

    vmem_cap = _vmem_capacity_bytes()
    budget_bytes = int(vmem_cap * 0.55)
    tm = _pick_tm(M, K, E, compute_dtype, out_dtype, budget_bytes)
    grid = (pl.cdiv(M, tm),)   # ragged last tile is masked; no M-pad copy

    # --- unfold x into the (M, K) patch matrix, feature order (c, kh, kw, kd).
    # Cast to bf16 *before* the transpose so the materialized intermediate
    # costs half the HBM bytes.  No padding anywhere.
    xr = x.astype(compute_dtype).reshape(B, C, Ho, p, Wo, p, Do, p)
    xr = jnp.transpose(xr, (0, 2, 4, 6, 1, 3, 5, 7))
    patches = xr.reshape(M, K)                                   # (M, K)

    cbytes = jnp.dtype(compute_dtype).itemsize
    obytes = jnp.dtype(out_dtype).itemsize
    cost = pl.CostEstimate(
        flops=2 * M * K * E,
        transcendentals=0,
        bytes_accessed=(M * K * cbytes + K * E * cbytes + E * 4
                        + M * E * obytes),
    )

    out = pl.pallas_call(
        _patch_embed_kernel,
        out_shape=jax.ShapeDtypeStruct((M, E), out_dtype),
        grid_spec=pltpu.PrefetchScalarGridSpec(
            num_scalar_prefetch=0,
            grid=grid,
            in_specs=[
                pl.BlockSpec((tm, K), lambda i: (i, 0)),
                pl.BlockSpec((K, E), lambda i: (0, 0),
                             pipeline_mode=pl.Buffered(1)),
                pl.BlockSpec((1, E), lambda i: (0, 0),
                             pipeline_mode=pl.Buffered(1)),
            ],
            out_specs=pl.BlockSpec((tm, E), lambda i: (i, 0)),
        ),
        compiler_params=pltpu.CompilerParams(
            dimension_semantics=("parallel",),
            vmem_limit_bytes=int(vmem_cap * 0.75),
        ),
        cost_estimate=cost,
    )(patches, w2d, b2d)

    return out.reshape(B, Np, E)


if __name__ == "__main__":
    # Small shapes consistent with the module:
    #   img_size=8 (cubic), patch_size=2, in_chans=4, embed_dim=32, batch=2
    B, C, S, P, E = 2, 4, 8, 2, 32

    key = jax.random.PRNGKey(0)
    kx, kw, kb = jax.random.split(key, 3)
    x = jax.random.normal(kx, (B, C, S, S, S), dtype=jnp.float32)
    # Deterministic parameter init (synthetic, not a checkpoint load).
    weight = jax.random.normal(kw, (E, C, P, P, P), dtype=jnp.float32) * 0.02
    bias = jax.random.normal(kb, (E,), dtype=jnp.float32) * 0.02

    # Parameter relayout is done once, outside the forward path.
    w2d, b2d = prepare_patch_embed_params(weight, bias)

    fwd = jax.jit(functools.partial(patch_embed_forward, patch_size=P))
    out = jax.block_until_ready(fwd(x, w2d, b2d))

    # Pure-JAX f32 reference (conv3d with stride=kernel == patch matmul).
    Ho = Wo = Do = S // P
    xr = x.reshape(B, C, Ho, P, Wo, P, Do, P)
    xr = jnp.transpose(xr, (0, 2, 4, 6, 1, 3, 5, 7)).reshape(B, Ho * Wo * Do, -1)
    ref = jnp.einsum("bnk,ek->bne", xr, weight.reshape(E, -1)) + bias

    assert out.shape == (B, Ho * Wo * Do, E)
    # bf16 operands / f32 accumulation -> loose-but-meaningful tolerance.
    assert jnp.allclose(out, ref, atol=1e-2, rtol=1e-2), float(
        jnp.max(jnp.abs(out - ref)))
    print("KERNEL_OK")
</pallas_src>

<mosaic_0001>
module attributes {stable_mosaic.version = 11 : i64} {
  func.func @_patch_embed_kernel(%arg0: i32, %arg1: memref<128x32xbf16, #tpu.memory_space<vmem>>, %arg2: memref<32x32xbf16, #tpu.memory_space<vmem>>, %arg3: memref<1x32xf32, #tpu.memory_space<vmem>>, %arg4: memref<128x32xf32, #tpu.memory_space<vmem>>) attributes {dimension_semantics = [#tpu.dimension_semantics<parallel>], iteration_bounds = array<i64: 1>, scalar_prefetch = 0 : i64, scratch_operands = 0 : i64, tpu.core_type = #tpu.core_type<tc>, window_params = [{transform_indices = @transform_0, window_bounds = array<i64: 128, 32>}, {pipeline_mode = #tpu.pipeline_mode<synchronous>, transform_indices = @transform_1, window_bounds = array<i64: 32, 32>}, {pipeline_mode = #tpu.pipeline_mode<synchronous>, transform_indices = @transform_2, window_bounds = array<i64: 1, 32>}, {transform_indices = @transform_3, window_bounds = array<i64: 128, 32>}]} {
    %c0 = arith.constant 0 : index
    %c0_0 = arith.constant 0 : index
    %0 = vector.load %arg1[%c0, %c0_0] : memref<128x32xbf16, #tpu.memory_space<vmem>>, vector<128x32xbf16>
    %c0_1 = arith.constant 0 : index
    %c0_2 = arith.constant 0 : index
    %1 = vector.load %arg2[%c0_1, %c0_2] : memref<32x32xbf16, #tpu.memory_space<vmem>>, vector<32x32xbf16>
    %cst = arith.constant dense<0.000000e+00> : vector<128x32xf32>
    %2 = tpu.matmul %0, %1, %cst {dimension_numbers = #tpu.dot_dimension_numbers<[1], [0], [0], [1], [0, 0, 1, 1], [], []>} : vector<128x32xbf16>, vector<32x32xbf16>, vector<128x32xf32> -> vector<128x32xf32>
    %c0_3 = arith.constant 0 : index
    %c0_4 = arith.constant 0 : index
    %3 = vector.load %arg3[%c0_3, %c0_4] : memref<1x32xf32, #tpu.memory_space<vmem>>, vector<1x32xf32>
    %4 = vector.broadcast %3 : vector<1x32xf32> to vector<128x32xf32>
    %5 = arith.addf %2, %4 : vector<128x32xf32>
    %c0_5 = arith.constant 0 : index
    %c0_6 = arith.constant 0 : index
    %6 = vector.load %arg4[%c0_5, %c0_6] : memref<128x32xf32, #tpu.memory_space<vmem>>, vector<128x32xf32>
    tpu.vector_store %arg4[%c0_5, %c0_6], %5 {strides = array<i32>} : memref<128x32xf32, #tpu.memory_space<vmem>>, vector<128x32xf32>,
    return
  }
  func.func @transform_0(%arg0: i32) -> (i32, i32) {
    %c0_i32 = arith.constant 0 : i32
    %c0_i32_0 = arith.constant 0 : i32
    return %arg0, %c0_i32 : i32, i32
  }
  func.func @transform_1(%arg0: i32) -> (i32, i32) {
    %c0_i32 = arith.constant 0 : i32
    %c0_i32_0 = arith.constant 0 : i32
    %c0_i32_1 = arith.constant 0 : i32
    return %c0_i32, %c0_i32_0 : i32, i32
  }
  func.func @transform_2(%arg0: i32) -> (i32, i32) {
    %c0_i32 = arith.constant 0 : i32
    %c0_i32_0 = arith.constant 0 : i32
    %c0_i32_1 = arith.constant 0 : i32
    return %c0_i32, %c0_i32_0 : i32, i32
  }
  func.func @transform_3(%arg0: i32) -> (i32, i32) {
    %c0_i32 = arith.constant 0 : i32
    %c0_i32_0 = arith.constant 0 : i32
    return %arg0, %c0_i32 : i32, i32
  }
}

</mosaic_0001>

<llo_original>
// kernel: patch_embed_forward.1
$region0: #{patch_embed_forward.1}
  #allocation0 [shape = 'u32[]', space=smem, size = 0x4, offset = 0x4, fixed_abs, tag = 'smem constant byte address 0x4 - core index']
  #allocation1 [shape = 'u32[144,128]{1,0:T(1,128)}', space=vmem, size = 0x12000, scoped, tag = 'internal scratch']
  %s0 = inlined_call_operand.vmem [shape: bf16[128,32], index: 0, kind: input, shape index: {}]
  %s1 = inlined_call_operand.vmem [shape: bf16[32,32], index: 1, kind: input, shape index: {}]
  %s2 = inlined_call_operand.vmem [shape: f32[1,32], index: 2, kind: input, shape index: {}]
  %s3 = inlined_call_operand.vmem [shape: f32[128,32], index: 3, kind: output, shape index: {}]
  %s4 = sld [smem:[#allocation0]]
  $region22: #{patch_embed_forward.1} parent=0
    _
  %s6 = ssub.s32 1, %s4
  %s7 = scalar_select 0, %s6, %s4
  // Predicated region
  $region2: #{patch_embed_forward.1} parent=0 // pred_check
    _
  $region3: #{patch_embed_forward.1} parent=0 // pred_check_branch
    %9 = sbr.rel (0) target = $region5
  $region4: #{patch_embed_forward.1} parent=0 // pred_region
    _
  $region5: #{patch_embed_forward.1} parent=0 // pred_fallthru
    _
  // Predicated region
  $region6: #{patch_embed_forward.1} parent=0 // pred_check
    _
  $region7: #{patch_embed_forward.1} parent=0 // pred_check_branch
    %11 = sbr.rel (0) target = $region9
  $region8: #{patch_embed_forward.1} parent=0 // pred_region
    _
  $region9: #{patch_embed_forward.1} parent=0 // pred_fallthru
    _
  // Predicated region
  $region10: #{patch_embed_forward.1} parent=0 // pred_check
    _
  $region11: #{patch_embed_forward.1} parent=0 // pred_check_branch
    %13 = sbr.rel (0) target = $region13
  $region12: #{patch_embed_forward.1} parent=0 // pred_region
    _
  $region13: #{patch_embed_forward.1} parent=0 // pred_fallthru
    _
  %v15 = vld [vmem:[%s0] sm:$0xf]
  %v16 = vld [vmem:[%s0 + $0x4] sm:$0xf]
  %v17 = vld [vmem:[%s0 + $0x8] sm:$0xf]
  %v18 = vld [vmem:[%s0 + $0xc] sm:$0xf]
  %v19 = vld [vmem:[%s0 + $0x10] sm:$0xf]
  %v20 = vld [vmem:[%s0 + $0x14] sm:$0xf]
  %v21 = vld [vmem:[%s0 + $0x18] sm:$0xf]
  %v22 = vld [vmem:[%s0 + $0x1c] sm:$0xf]
  %v23 = vld [vmem:[%s0 + $0x20] sm:$0xf]
  %v24 = vld [vmem:[%s0 + $0x24] sm:$0xf]
  %v25 = vld [vmem:[%s0 + $0x28] sm:$0xf]
  %v26 = vld [vmem:[%s0 + $0x2c] sm:$0xf]
  %v27 = vld [vmem:[%s0 + $0x30] sm:$0xf]
  %v28 = vld [vmem:[%s0 + $0x34] sm:$0xf]
  %v29 = vld [vmem:[%s0 + $0x38] sm:$0xf]
  %v30 = vld [vmem:[%s0 + $0x3c] sm:$0xf]
  %v31 = vld [vmem:[%s1] sm:$0xf]
  %v32 = vld [vmem:[%s1 + $0x4] sm:$0xf]
  %v33 = vld [vmem:[%s1 + $0x8] sm:$0xf]
  %v34 = vld [vmem:[%s1 + $0xc] sm:$0xf]
  %v35 = vld [vmem:[%s2] sm:$0x1]
  %v37 = vlaneseq
  %v38 = vshrl.u32 %v37, 7
  %v39 = vsub.s32 0, %v38
  %v40 = vrot.slane %v35, %v39
  %v58 = vunpack.c.l.b16 %v15
  %v59 = vunpack.c.l.b16 %v16
  %v60 = vunpack.c.l.b16 %v17
  %v61 = vunpack.c.l.b16 %v18
  %v62 = vunpack.c.l.b16 %v19
  %v63 = vunpack.c.l.b16 %v20
  %v64 = vunpack.c.l.b16 %v21
  %v65 = vunpack.c.l.b16 %v22
  %v66 = vunpack.c.l.b16 %v23
  %v67 = vunpack.c.l.b16 %v24
  %v68 = vunpack.c.l.b16 %v25
  %v69 = vunpack.c.l.b16 %v26
  %v70 = vunpack.c.l.b16 %v27
  %v71 = vunpack.c.l.b16 %v28
  %v72 = vunpack.c.l.b16 %v29
  %v73 = vunpack.c.l.b16 %v30
  %v74 = vpack.c.b16 %v59, %v58
  %v75 = vpack.c.b16 %v61, %v60
  %v76 = vpack.c.b16 %v63, %v62
  %v77 = vpack.c.b16 %v65, %v64
  %v78 = vpack.c.b16 %v67, %v66
  %v79 = vpack.c.b16 %v69, %v68
  %v80 = vpack.c.b16 %v71, %v70
  %v81 = vpack.c.b16 %v73, %v72
  %v86 = vunpack.c.l.b16 %v31
  %v87 = vunpack.c.l.b16 %v32
  %v88 = vunpack.c.l.b16 %v33
  %v89 = vunpack.c.l.b16 %v34
  %v90 = vpack.c.b16 %v87, %v86
  %v91 = vpack.c.b16 %v89, %v88
  %vm94 = vcmask 261120
  %v96 = vsel %vm94, %v74, 0
  %v99 = vsel %vm94, %v75, 0
  %v102 = vsel %vm94, %v76, 0
  %v105 = vsel %vm94, %v77, 0
  %v108 = vsel %vm94, %v78, 0
  %v111 = vsel %vm94, %v79, 0
  %v114 = vsel %vm94, %v80, 0
  %v117 = vsel %vm94, %v81, 0
  %119 = vmatprep.subr.bf16.mxu0 0
  %120 = vmatpush1.bf16.msra.mxu0 %v90
  %121 = vmatprep.subr.bf16.mxu0 0
  %122 = vmatpush1.bf16.msra.mxu0 %v91
  %123 = vmatprep.subr.bf16.mxu0 0
  %124 = vmatpush1.bf16.msra.mxu0 0
  %125 = vmatprep.subr.bf16.mxu0 0
  %126 = vmatpush1.bf16.msra.mxu0 0
  %127 = vmatprep.subr.bf16.mxu0 0
  %128 = vmatpush1.bf16.msra.mxu0 0
  %129 = vmatprep.subr.bf16.mxu0 0
  %130 = vmatpush1.bf16.msra.mxu0 0
  %131 = vmatprep.subr.bf16.mxu0 0
  %132 = vmatpush1.bf16.msra.mxu0 0
  %133 = vmatprep.subr.bf16.mxu0 0
  %134 = vmatpush1.bf16.msra.mxu0 0
  %135 = vmatprep.subr.bf16.mxu0 0
  %136 = vmatpush1.bf16.msra.mxu0 0
  %137 = vmatprep.subr.bf16.mxu0 0
  %138 = vmatpush1.bf16.msra.mxu0 0
  %139 = vmatprep.subr.bf16.mxu0 0
  %140 = vmatpush1.bf16.msra.mxu0 0
  %141 = vmatprep.subr.bf16.mxu0 0
  %142 = vmatpush1.bf16.msra.mxu0 0
  %143 = vmatprep.subr.bf16.mxu0 0
  %144 = vmatpush1.bf16.msra.mxu0 0
  %145 = vmatprep.subr.bf16.mxu0 0
  %146 = vmatpush1.bf16.msra.mxu0 0
  %147 = vmatprep.subr.bf16.mxu0 0
  %148 = vmatpush1.bf16.msra.mxu0 0
  %149 = vmatprep.subr.bf16.mxu0 0
  %150 = vmatpush1.bf16.msra.mxu0 0
  %151 = vmatprep.mubr.bf16.mxu0 0
  %152 = vmatmul.mubr.bf16.gmra.mrb[0].mxu0 %v96
  %v153 = vpop.f32.mrb[0].mxu0
  %v154 = vadd.f32 %v40, %v153
  %v155 = vpop.f32.mrb[0].mxu0
  %v156 = vpop.f32.mrb[0].mxu0
  %v157 = vadd.f32 %v40, %v156
  %v158 = vpop.f32.mrb[0].mxu0
  %159 = vmatprep.mubr.bf16.mxu0 0
  %160 = vmatmul.mubr.bf16.gmra.mrb[0].mxu0 %v99
  %v161 = vpop.f32.mrb[0].mxu0
  %v162 = vadd.f32 %v40, %v161
  %v163 = vpop.f32.mrb[0].mxu0
  %v164 = vpop.f32.mrb[0].mxu0
  %v165 = vadd.f32 %v40, %v164
  %v166 = vpop.f32.mrb[0].mxu0
  %167 = vmatprep.mubr.bf16.mxu0 0
  %168 = vmatmul.mubr.bf16.gmra.mrb[0].mxu0 %v102
  %v169 = vpop.f32.mrb[0].mxu0
  %v170 = vadd.f32 %v40, %v169
  %v171 = vpop.f32.mrb[0].mxu0
  %v172 = vpop.f32.mrb[0].mxu0
  %v173 = vadd.f32 %v40, %v172
  %v174 = vpop.f32.mrb[0].mxu0
  %175 = vmatprep.mubr.bf16.mxu0 0
  %176 = vmatmul.mubr.bf16.gmra.mrb[0].mxu0 %v105
  %v177 = vpop.f32.mrb[0].mxu0
  %v178 = vadd.f32 %v40, %v177
  %v179 = vpop.f32.mrb[0].mxu0
  %v180 = vpop.f32.mrb[0].mxu0
  %v181 = vadd.f32 %v40, %v180
  %v182 = vpop.f32.mrb[0].mxu0
  %183 = vmatprep.mubr.bf16.mxu0 0
  %184 = vmatmul.mubr.bf16.gmra.mrb[0].mxu0 %v108
  %v185 = vpop.f32.mrb[0].mxu0
  %v186 = vadd.f32 %v40, %v185
  %v187 = vpop.f32.mrb[0].mxu0
  %v188 = vpop.f32.mrb[0].mxu0
  %v189 = vadd.f32 %v40, %v188
  %v190 = vpop.f32.mrb[0].mxu0
  %191 = vmatprep.mubr.bf16.mxu0 0
  %192 = vmatmul.mubr.bf16.gmra.mrb[0].mxu0 %v111
  %v193 = vpop.f32.mrb[0].mxu0
  %v194 = vadd.f32 %v40, %v193
  %v195 = vpop.f32.mrb[0].mxu0
  %v196 = vpop.f32.mrb[0].mxu0
  %v197 = vadd.f32 %v40, %v196
  %v198 = vpop.f32.mrb[0].mxu0
  %199 = vmatprep.mubr.bf16.mxu0 0
  %200 = vmatmul.mubr.bf16.gmra.mrb[0].mxu0 %v114
  %v201 = vpop.f32.mrb[0].mxu0
  %v202 = vadd.f32 %v40, %v201
  %v203 = vpop.f32.mrb[0].mxu0
  %v204 = vpop.f32.mrb[0].mxu0
  %v205 = vadd.f32 %v40, %v204
  %v206 = vpop.f32.mrb[0].mxu0
  %207 = vmatprep.mubr.bf16.mxu0 0
  %208 = vmatmul.mubr.bf16.gmra.mrb[0].mxu0 %v117
  %v209 = vpop.f32.mrb[0].mxu0
  %v210 = vadd.f32 %v40, %v209
  %v211 = vpop.f32.mrb[0].mxu0
  %v212 = vpop.f32.mrb[0].mxu0
  %v213 = vadd.f32 %v40, %v212
  %v214 = vpop.f32.mrb[0].mxu0
  %215 = vdwg.mxu0
  %216 = vst.msk [vmem:[%s3] sm:$0xff] %vm94, %v154
  %217 = vst.msk [vmem:[%s3 + $0x8] sm:$0xff] %vm94, %v157
  %218 = vst.msk [vmem:[%s3 + $0x10] sm:$0xff] %vm94, %v162
  %219 = vst.msk [vmem:[%s3 + $0x18] sm:$0xff] %vm94, %v165
  %220 = vst.msk [vmem:[%s3 + $0x20] sm:$0xff] %vm94, %v170
  %221 = vst.msk [vmem:[%s3 + $0x28] sm:$0xff] %vm94, %v173
  %222 = vst.msk [vmem:[%s3 + $0x30] sm:$0xff] %vm94, %v178
  %223 = vst.msk [vmem:[%s3 + $0x38] sm:$0xff] %vm94, %v181
  %224 = vst.msk [vmem:[%s3 + $0x40] sm:$0xff] %vm94, %v186
  %225 = vst.msk [vmem:[%s3 + $0x48] sm:$0xff] %vm94, %v189
  %226 = vst.msk [vmem:[%s3 + $0x50] sm:$0xff] %vm94, %v194
  %227 = vst.msk [vmem:[%s3 + $0x58] sm:$0xff] %vm94, %v197
  %228 = vst.msk [vmem:[%s3 + $0x60] sm:$0xff] %vm94, %v202
  %229 = vst.msk [vmem:[%s3 + $0x68] sm:$0xff] %vm94, %v205
  %230 = vst.msk [vmem:[%s3 + $0x70] sm:$0xff] %vm94, %v210
  %231 = vst.msk [vmem:[%s3 + $0x78] sm:$0xff] %vm94, %v213
  // Predicated region
  $region14: #{patch_embed_forward.1} parent=0 // pred_check
    _
  $region15: #{patch_embed_forward.1} parent=0 // pred_check_branch
    %233 = sbr.rel (0) target = $region17
  $region16: #{patch_embed_forward.1} parent=0 // pred_region
    _
  $region17: #{patch_embed_forward.1} parent=0 // pred_fallthru
    _
  // Predicated region
  $region18: #{patch_embed_forward.1} parent=0 // pred_check
    _
  $region19: #{patch_embed_forward.1} parent=0 // pred_check_branch
    %235 = sbr.rel (0) target = $region21
  $region20: #{patch_embed_forward.1} parent=0 // pred_region
    _
  $region21: #{patch_embed_forward.1} parent=0 // pred_fallthru
    _

</llo_original>
